<compile_context>
chip_gen: v7x
topology: tpu7x:2x2x1
jax: 0.10.0
libtpu: 0.0.40
codegen_flags: <defaults>
</compile_context>

<pallas_src>
import jax
import jax.numpy as jnp
from jax.experimental import pallas as pl
from jax.experimental.pallas import tpu as pltpu

_LANE = 128
_SUB = 8


def _custom_loss_kernel(accel_ref, steer_ref, brake_ref, labels_ref, out_ref, acc_ref):
    i = pl.program_id(1)

    @pl.when(i == 0)
    def _():
        acc_ref[...] = jnp.zeros_like(acc_ref)

    # Dense (tile_rows, 128) tiles; upcast in-kernel (inputs may be bf16).
    a = accel_ref[...].astype(jnp.float32)
    s = steer_ref[...].astype(jnp.float32)
    p = brake_ref[...].astype(jnp.float32)
    ya = labels_ref[0].astype(jnp.float32)
    ys = labels_ref[1].astype(jnp.float32)
    yb = labels_ref[2].astype(jnp.float32)

    d_acc = a - ya
    d_st = s - ys

    # BCE restricted to the brake channel only (PyTorch BCELoss log clamp at -100).
    log_p = jnp.maximum(jnp.log(p), -100.0)
    log_1mp = jnp.maximum(jnp.log(1.0 - p), -100.0)

    # One fused weighted elementwise pass; pure VPU add into the VMEM accumulator.
    acc_ref[...] += (0.5 * d_acc * d_acc
                     + d_st * d_st
                     - (yb * log_p + (1.0 - yb) * log_1mp))

    @pl.when(i == pl.num_programs(1) - 1)
    def _():
        acc = acc_ref[...]
        tr = acc.shape[0]
        # Tile-aligned regroup of the sublane axis, then a leading-axis (VPU) sum
        # down to one (8, 128) partial-sum block per core.  Single reduction per core.
        out_ref[...] = acc.reshape(tr // _SUB, _SUB, _LANE).sum(axis=0)


def custom_loss(acceleration, steer, brake, batch_label, *, tile_rows=2048, num_cores=2):
    """Pallas equivalent of CustomLoss.forward. Returns a scalar float32."""
    B = acceleration.shape[0]
    assert B > 0
    assert acceleration.shape == (B, 1)
    assert steer.shape == (B, 1)
    assert brake.shape == (B, 1)
    assert batch_label.shape == (B, 3)

    rows = pl.cdiv(B, _LANE)
    tr = min(int(tile_rows), pl.cdiv(rows, _SUB) * _SUB)
    tr = max(_SUB, (tr // _SUB) * _SUB)                    # multiple of 8 rows per step
    tiles_per_core = max(1, pl.cdiv(rows, tr * num_cores))
    rows_p = num_cores * tiles_per_core * tr
    bp = rows_p * _LANE

    def prep(x):  # (B, 1) -> (rows_p, 128), zero-padded tail (loss-neutral)
        x = x.reshape(-1)
        if bp > B:
            x = jnp.pad(x, (0, bp - B))
        return x.reshape(rows_p, _LANE)

    a2 = prep(acceleration)
    s2 = prep(steer)
    b2 = prep(brake)

    lbl = batch_label.T                                    # (3, B) — single small fused transpose
    if bp > B:
        lbl = jnp.pad(lbl, ((0, 0), (0, bp - B)))
    lbl = lbl.reshape(3, rows_p, _LANE)

    pred_spec = pl.BlockSpec((tr, _LANE), lambda c, i: (c * tiles_per_core + i, 0))
    label_spec = pl.BlockSpec((3, tr, _LANE), lambda c, i: (0, c * tiles_per_core + i, 0))

    out = pl.pallas_call(
        _custom_loss_kernel,
        out_shape=jax.ShapeDtypeStruct((num_cores * _SUB, _LANE), jnp.float32),
        grid=(num_cores, tiles_per_core),
        in_specs=[pred_spec, pred_spec, pred_spec, label_spec],
        out_specs=pl.BlockSpec((_SUB, _LANE), lambda c, i: (c, 0)),
        scratch_shapes=[pltpu.VMEM((tr, _LANE), jnp.float32)],
        compiler_params=pltpu.CompilerParams(
            dimension_semantics=("parallel", "arbitrary"),
            vmem_limit_bytes=32 * 1024 * 1024,
        ),
    )(a2, s2, b2, lbl)

    # Final tiny reduction of the per-core (8,128) partials + the mean (1/B) scale.
    return jnp.sum(out) * (1.0 / B)


def _reference_loss(acceleration, steer, brake, batch_label):
    # Pure-JAX reference mirroring the PyTorch module, for sanity checking.
    y_acc = batch_label[:, 0:1]
    y_steer = batch_label[:, 1:2]
    y_brake = batch_label[:, 2:3]
    steer_loss = jnp.mean((steer - y_steer) ** 2)
    accel_loss = jnp.mean((acceleration - y_acc) ** 2)
    log_p = jnp.maximum(jnp.log(brake), -100.0)
    log_1mp = jnp.maximum(jnp.log(1.0 - brake), -100.0)
    brake_loss = -jnp.mean(y_brake * log_p + (1.0 - y_brake) * log_1mp)
    return steer_loss + brake_loss + 0.5 * accel_loss


def _make_inputs(key, B):
    k1, k2, k3, k4, k5, k6 = jax.random.split(key, 6)
    acceleration = jax.random.normal(k1, (B, 1), dtype=jnp.float32)
    steer = jax.random.normal(k2, (B, 1), dtype=jnp.float32)
    # brake must be a probability in (0,1) for BCELoss
    brake = jax.nn.sigmoid(jax.random.normal(k3, (B, 1), dtype=jnp.float32))
    label_accel = jax.random.normal(k4, (B, 1), dtype=jnp.float32)
    label_steer = jax.random.normal(k5, (B, 1), dtype=jnp.float32)
    label_brake = jax.random.bernoulli(k6, 0.5, (B, 1)).astype(jnp.float32)
    batch_label = jnp.concatenate([label_accel, label_steer, label_brake], axis=1)
    return acceleration, steer, brake, batch_label


if __name__ == "__main__":
    key = jax.random.PRNGKey(0)
    k_small, k_multi = jax.random.split(key)

    # Small batch (B=8): single tile per core, exercises zero padding + the
    # 2-core parallel axis (core 1 sees an all-pad tile -> contributes 0).
    a, s, b, lbl = _make_inputs(k_small, 8)
    loss = custom_loss(a, s, b, lbl)
    jax.block_until_ready(loss)
    ref = _reference_loss(a, s, b, lbl)
    assert jnp.allclose(loss, ref, rtol=1e-4, atol=1e-5), (loss, ref)

    # Non-multiple-of-128 batch with a deliberately tiny tile -> multiple grid
    # steps per core (exercises the VMEM accumulator init / finalize path).
    a, s, b, lbl = _make_inputs(k_multi, 4200)
    loss2 = custom_loss(a, s, b, lbl, tile_rows=8)
    jax.block_until_ready(loss2)
    ref2 = _reference_loss(a, s, b, lbl)
    assert jnp.allclose(loss2, ref2, rtol=1e-4, atol=1e-5), (loss2, ref2)

    print("KERNEL_OK")
</pallas_src>

<mosaic_0001>
module attributes {stable_mosaic.version = 11 : i64} {
  func.func @_custom_loss_kernel(%arg0: i32, %arg1: i32, %arg2: memref<8x128xf32, #tpu.memory_space<vmem>>, %arg3: memref<8x128xf32, #tpu.memory_space<vmem>>, %arg4: memref<8x128xf32, #tpu.memory_space<vmem>>, %arg5: memref<3x8x128xf32, #tpu.memory_space<vmem>>, %arg6: memref<8x128xf32, #tpu.memory_space<vmem>>, %arg7: memref<8x128xf32, #tpu.memory_space<vmem>>) attributes {dimension_semantics = [#tpu.dimension_semantics<parallel>, #tpu.dimension_semantics<arbitrary>], iteration_bounds = array<i64: 2, 1>, scalar_prefetch = 0 : i64, scratch_operands = 1 : i64, tpu.core_type = #tpu.core_type<tc>, window_params = [{transform_indices = @transform_0, window_bounds = array<i64: 8, 128>}, {transform_indices = @transform_1, window_bounds = array<i64: 8, 128>}, {transform_indices = @transform_2, window_bounds = array<i64: 8, 128>}, {transform_indices = @transform_3, window_bounds = array<i64: 3, 8, 128>}, {transform_indices = @transform_4, window_bounds = array<i64: 8, 128>}]} {
    %c0_i32 = arith.constant 0 : i32
    %0 = arith.cmpi eq, %arg1, %c0_i32 : i32
    %1 = arith.extui %0 : i1 to i32
    %c0_i32_0 = arith.constant 0 : i32
    %2 = arith.cmpi ne, %1, %c0_i32_0 : i32
    scf.if %2 {
      %cst_23 = arith.constant 0.000000e+00 : f32
      %39 = vector.broadcast %cst_23 : f32 to vector<8x128xf32>
      %c0_24 = arith.constant 0 : index
      %c0_25 = arith.constant 0 : index
      %40 = vector.load %arg7[%c0_24, %c0_25] : memref<8x128xf32, #tpu.memory_space<vmem>>, vector<8x128xf32>
      tpu.vector_store %arg7[%c0_24, %c0_25], %39 {strides = array<i32>} : memref<8x128xf32, #tpu.memory_space<vmem>>, vector<8x128xf32>,
    } else {
    }
    %c0 = arith.constant 0 : index
    %c0_1 = arith.constant 0 : index
    %3 = vector.load %arg2[%c0, %c0_1] : memref<8x128xf32, #tpu.memory_space<vmem>>, vector<8x128xf32>
    %c0_2 = arith.constant 0 : index
    %c0_3 = arith.constant 0 : index
    %4 = vector.load %arg3[%c0_2, %c0_3] : memref<8x128xf32, #tpu.memory_space<vmem>>, vector<8x128xf32>
    %c0_4 = arith.constant 0 : index
    %c0_5 = arith.constant 0 : index
    %5 = vector.load %arg4[%c0_4, %c0_5] : memref<8x128xf32, #tpu.memory_space<vmem>>, vector<8x128xf32>
    %c0_6 = arith.constant 0 : index
    %c0_7 = arith.constant 0 : index
    %c0_8 = arith.constant 0 : index
    %6 = vector.load %arg5[%c0_6, %c0_7, %c0_8] : memref<3x8x128xf32, #tpu.memory_space<vmem>>, vector<1x8x128xf32>
    %7 = vector.shape_cast %6 : vector<1x8x128xf32> to vector<8x128xf32>
    %c1 = arith.constant 1 : index
    %c0_9 = arith.constant 0 : index
    %c0_10 = arith.constant 0 : index
    %8 = vector.load %arg5[%c1, %c0_9, %c0_10] : memref<3x8x128xf32, #tpu.memory_space<vmem>>, vector<1x8x128xf32>
    %9 = vector.shape_cast %8 : vector<1x8x128xf32> to vector<8x128xf32>
    %c2 = arith.constant 2 : index
    %c0_11 = arith.constant 0 : index
    %c0_12 = arith.constant 0 : index
    %10 = vector.load %arg5[%c2, %c0_11, %c0_12] : memref<3x8x128xf32, #tpu.memory_space<vmem>>, vector<1x8x128xf32>
    %11 = vector.shape_cast %10 : vector<1x8x128xf32> to vector<8x128xf32>
    %12 = arith.subf %3, %7 : vector<8x128xf32>
    %13 = arith.subf %4, %9 : vector<8x128xf32>
    %14 = math.log %5 : vector<8x128xf32>
    %cst = arith.constant -1.000000e+02 : f32
    %15 = vector.broadcast %cst : f32 to vector<8x128xf32>
    %16 = arith.maximumf %14, %15 : vector<8x128xf32>
    %cst_13 = arith.constant 1.000000e+00 : f32
    %17 = vector.broadcast %cst_13 : f32 to vector<8x128xf32>
    %18 = arith.subf %17, %5 : vector<8x128xf32>
    %19 = math.log %18 : vector<8x128xf32>
    %cst_14 = arith.constant -1.000000e+02 : f32
    %20 = vector.broadcast %cst_14 : f32 to vector<8x128xf32>
    %21 = arith.maximumf %19, %20 : vector<8x128xf32>
    %c0_15 = arith.constant 0 : index
    %c0_16 = arith.constant 0 : index
    %22 = vector.load %arg7[%c0_15, %c0_16] : memref<8x128xf32, #tpu.memory_space<vmem>>, vector<8x128xf32>
    %cst_17 = arith.constant 5.000000e-01 : f32
    %23 = vector.broadcast %cst_17 : f32 to vector<8x128xf32>
    %24 = arith.mulf %23, %12 : vector<8x128xf32>
    %25 = arith.mulf %24, %12 : vector<8x128xf32>
    %26 = arith.mulf %13, %13 : vector<8x128xf32>
    %27 = arith.addf %25, %26 : vector<8x128xf32>
    %28 = arith.mulf %11, %16 : vector<8x128xf32>
    %cst_18 = arith.constant 1.000000e+00 : f32
    %29 = vector.broadcast %cst_18 : f32 to vector<8x128xf32>
    %30 = arith.subf %29, %11 : vector<8x128xf32>
    %31 = arith.mulf %30, %21 : vector<8x128xf32>
    %32 = arith.addf %28, %31 : vector<8x128xf32>
    %33 = arith.subf %27, %32 : vector<8x128xf32>
    %34 = arith.addf %22, %33 : vector<8x128xf32>
    %c0_19 = arith.constant 0 : index
    %c0_20 = arith.constant 0 : index
    %35 = vector.load %arg7[%c0_19, %c0_20] : memref<8x128xf32, #tpu.memory_space<vmem>>, vector<8x128xf32>
    tpu.vector_store %arg7[%c0_19, %c0_20], %34 {strides = array<i32>} : memref<8x128xf32, #tpu.memory_space<vmem>>, vector<8x128xf32>,
    %c0_i32_21 = arith.constant 0 : i32
    %36 = arith.cmpi eq, %arg1, %c0_i32_21 : i32
    %37 = arith.extui %36 : i1 to i32
    %c0_i32_22 = arith.constant 0 : i32
    %38 = arith.cmpi ne, %37, %c0_i32_22 : i32
    scf.if %38 {
      %c0_23 = arith.constant 0 : index
      %c0_24 = arith.constant 0 : index
      %39 = vector.load %arg7[%c0_23, %c0_24] : memref<8x128xf32, #tpu.memory_space<vmem>>, vector<8x128xf32>
      %40 = vector.shape_cast %39 : vector<8x128xf32> to vector<1x8x128xf32>
      %cst_25 = arith.constant dense<0.000000e+00> : vector<8x128xf32>
      %41 = vector.multi_reduction <add>, %40, %cst_25 [0] : vector<1x8x128xf32> to vector<8x128xf32>
      %c0_26 = arith.constant 0 : index
      %c0_27 = arith.constant 0 : index
      %42 = vector.load %arg6[%c0_26, %c0_27] : memref<8x128xf32, #tpu.memory_space<vmem>>, vector<8x128xf32>
      tpu.vector_store %arg6[%c0_26, %c0_27], %41 {strides = array<i32>} : memref<8x128xf32, #tpu.memory_space<vmem>>, vector<8x128xf32>,
    } else {
    }
    return
  }
  func.func @transform_0(%arg0: i32, %arg1: i32) -> (i32, i32) {
    %c1_i32 = arith.constant 1 : i32
    %0 = arith.muli %arg0, %c1_i32 : i32
    %1 = arith.addi %0, %arg1 : i32
    %c0_i32 = arith.constant 0 : i32
    %c0_i32_0 = arith.constant 0 : i32
    return %1, %c0_i32 : i32, i32
  }
  func.func @transform_1(%arg0: i32, %arg1: i32) -> (i32, i32) {
    %c1_i32 = arith.constant 1 : i32
    %0 = arith.muli %arg0, %c1_i32 : i32
    %1 = arith.addi %0, %arg1 : i32
    %c0_i32 = arith.constant 0 : i32
    %c0_i32_0 = arith.constant 0 : i32
    return %1, %c0_i32 : i32, i32
  }
  func.func @transform_2(%arg0: i32, %arg1: i32) -> (i32, i32) {
    %c1_i32 = arith.constant 1 : i32
    %0 = arith.muli %arg0, %c1_i32 : i32
    %1 = arith.addi %0, %arg1 : i32
    %c0_i32 = arith.constant 0 : i32
    %c0_i32_0 = arith.constant 0 : i32
    return %1, %c0_i32 : i32, i32
  }
  func.func @transform_3(%arg0: i32, %arg1: i32) -> (i32, i32, i32) {
    %c1_i32 = arith.constant 1 : i32
    %0 = arith.muli %arg0, %c1_i32 : i32
    %1 = arith.addi %0, %arg1 : i32
    %c0_i32 = arith.constant 0 : i32
    %c0_i32_0 = arith.constant 0 : i32
    %c0_i32_1 = arith.constant 0 : i32
    return %c0_i32, %1, %c0_i32_0 : i32, i32, i32
  }
  func.func @transform_4(%arg0: i32, %arg1: i32) -> (i32, i32) {
    %c0_i32 = arith.constant 0 : i32
    %c0_i32_0 = arith.constant 0 : i32
    return %arg0, %c0_i32 : i32, i32
  }
}

</mosaic_0001>

<llo_original>
// kernel: tpu_custom_call.1
$region0: #{tpu_custom_call.1}
  #allocation0 [shape = 'u32[]', space=smem, size = 0x4, offset = 0x4, fixed_abs, tag = 'smem constant byte address 0x4 - core index']
  #allocation1 [shape = 'u32[144,128]{1,0:T(1,128)}', space=vmem, size = 0x12000, scoped, tag = 'internal scratch']
  #allocation2 [shape = 'f32[8,128]{1,0:T(8,128)}', space=vmem, size = 0x1000, scoped, tag = 'scratch operand']
  %s0 = inlined_call_operand.hbm [shape: f32[16,128], index: 0, kind: input, shape index: {}]
  %s1 = inlined_call_operand.hbm [shape: f32[16,128], index: 1, kind: input, shape index: {}]
  %s2 = inlined_call_operand.hbm [shape: f32[16,128], index: 2, kind: input, shape index: {}]
  %s3 = inlined_call_operand.hbm [shape: f32[3,16,128], index: 3, kind: input, shape index: {}]
  %s4 = inlined_call_operand.hbm [shape: f32[16,128], index: 4, kind: output, shape index: {}]
  %s5 = sld [smem:[#allocation0]]
  $region73: #{tpu_custom_call.1} parent=0
    _
  %s7 = ssub.s32 1, %s5
  %s8 = scalar_select 0, %s7, %s5
  $region1: #{tpu_custom_call.1} parent=0
    #allocation3 [shape = 'u8[8192]{0}', space=vmem, size = 0x2000, scoped, tag = 'input window, operand 0']
    #allocation4 [shape = 's32[2]{0}', space=sflag, size = 0x8, scoped, tag = 'scoped memory for tpu_custom_call.1']
    #allocation5 [shape = 's32[2]{0}', space=sflag, size = 0x8, scoped, tag = 'scoped memory for tpu_custom_call.1']
    #allocation6 [shape = 'u8[8192]{0}', space=vmem, size = 0x2000, scoped, tag = 'input window, operand 1']
    #allocation7 [shape = 's32[2]{0}', space=sflag, size = 0x8, scoped, tag = 'scoped memory for tpu_custom_call.1']
    #allocation8 [shape = 'u8[8192]{0}', space=vmem, size = 0x2000, scoped, tag = 'input window, operand 2']
    #allocation9 [shape = 'u8[24576]{0}', space=vmem, size = 0x6000, scoped, tag = 'input window, operand 3']
    #allocation10 [shape = 's32[2]{0}', space=sflag, size = 0x8, scoped, tag = 'scoped memory for tpu_custom_call.1']
    #allocation11 [shape = 'u8[8192]{0}', space=vmem, size = 0x2000, scoped, tag = 'output window, operand 0']
    %9 = vsyncpa [#allocation4], 0
    %s10 = scalar_lea.sflag [#allocation4], 1
    %11 = vsyncpa %s10, 0
    %12 = vsyncpa [#allocation7], 0
    %s13 = scalar_lea.sflag [#allocation7], 1
    %14 = vsyncpa %s13, 0
    %15 = vsyncpa [#allocation10], 0
    %s16 = scalar_lea.sflag [#allocation10], 1
    %17 = vsyncpa %s16, 0
    %18 = vsyncpa [#allocation5], 0
    %s19 = scalar_lea.sflag [#allocation5], 1
    %20 = vsyncpa %s19, 0
    loop: start=0, step=1, limit=4
    $region2: #{tpu_custom_call.1} parent=1 // loop_pre_header
      _
    $region3: #{tpu_custom_call.1} parent=1 // loop_header
      %s22 = sphi 0, %s26
      %p23 = scmp.ge.s32.totalorder %s22, 4
      %s29 = sphi 0, %s41
      %s30 = sphi 0, %s37
      %s31 = sphi 0, %s29
      %s32 = sphi 0, %s30
      %s33 = sphi 0, %s31
      %s34 = sphi 0, %s32
      %s46 = sphi 0, %s48
      %s49 = sphi 0, %s46
      %s50 = sphi 0, %s49
      %s66 = sphi 0, %s50
      %s74 = sphi 0, %s76
      %s77 = sphi 0, %s74
      %s78 = sphi 0, %s77
      %s94 = sphi 0, %s78
      %s102 = sphi 0, %s104
      %s105 = sphi 0, %s102
      %s106 = sphi 0, %s105
      %s122 = sphi 0, %s106
      %s130 = sphi 0, %s132
      %s133 = sphi 0, %s130
      %s134 = sphi 0, %s133
      %s150 = sphi 0, %s134
      %s156 = sphi 0, %s158
      %s159 = sphi 0, %s156
      %s160 = sphi 0, %s159
      %s176 = sphi 0, %s160
    $region4: #{tpu_custom_call.1} parent=1 // loop_header_branch
      %25 = sbr.rel (%p23) target = $region8
    $region5: #{tpu_custom_call.1} parent=1 // loop_body
      %s27 = ssub.s32 %s22, 1
      %s28 = ssub.s32 %s22, 2
      %s35 = sadd.s32 1, %s30
      %p36 = scmp.ge.s32.totalorder %s35, 1
      %s37 = scalar_select %p36, 0, %s35
      %s38 = sadd.s32 1, %s29
      %s39 = scalar_select %p36, %s38, %s29
      %p40 = scmp.ge.s32.totalorder %s39, 2
      %s41 = scalar_select %p40, 0, %s39
      %s42 = sadd.s32 %s29, %s30
      %s43 = sadd.s32 %s41, %s37
      %s44 = ssub.s32 %s42, %s43
      %p45 = scmp.eq.s32.totalorder %s44, 0
      %s47 = sadd.s32 %s46, 1
      %s48 = scalar_select %p45, %s46, %s47
      %p51 = pneg %p45
      %p52 = scmp.eq.s32.totalorder %s22, 1
      %p53 = por %p51, %p52
      %p54 = scmp.ne.s32.totalorder %s46, %s49
      %p55 = scmp.eq.s32.totalorder %s22, 0
      %p56 = por %p54, %p55
      %p57 = scmp.ne.s32.totalorder %s46, %s49
      %p58 = scmp.eq.s32.totalorder %s27, 1
      %p59 = por %p57, %p58
      %p60 = scmp.ne.s32.totalorder %s49, %s50
      %p61 = scmp.eq.s32.totalorder %s27, 0
      %p62 = por %p60, %p61
      %p63 = scmp.ne.s32.totalorder %s49, %s50
      %p64 = scmp.eq.s32.totalorder %s28, 1
      %p65 = por %p63, %p64
      %p67 = scmp.ne.s32.totalorder %s50, %s66
      %p68 = scmp.eq.s32.totalorder %s28, 0
      %p69 = por %p67, %p68
      %s70 = sadd.s32 %s29, %s30
      %s71 = sadd.s32 %s41, %s37
      %s72 = ssub.s32 %s70, %s71
      %p73 = scmp.eq.s32.totalorder %s72, 0
      %s75 = sadd.s32 %s74, 1
      %s76 = scalar_select %p73, %s74, %s75
      %p79 = pneg %p73
      %p80 = scmp.eq.s32.totalorder %s22, 1
      %p81 = por %p79, %p80
      %p82 = scmp.ne.s32.totalorder %s74, %s77
      %p83 = scmp.eq.s32.totalorder %s22, 0
      %p84 = por %p82, %p83
      %p85 = scmp.ne.s32.totalorder %s74, %s77
      %p86 = scmp.eq.s32.totalorder %s27, 1
      %p87 = por %p85, %p86
      %p88 = scmp.ne.s32.totalorder %s77, %s78
      %p89 = scmp.eq.s32.totalorder %s27, 0
      %p90 = por %p88, %p89
      %p91 = scmp.ne.s32.totalorder %s77, %s78
      %p92 = scmp.eq.s32.totalorder %s28, 1
      %p93 = por %p91, %p92
      %p95 = scmp.ne.s32.totalorder %s78, %s94
      %p96 = scmp.eq.s32.totalorder %s28, 0
      %p97 = por %p95, %p96
      %s98 = sadd.s32 %s29, %s30
      %s99 = sadd.s32 %s41, %s37
      %s100 = ssub.s32 %s98, %s99
      %p101 = scmp.eq.s32.totalorder %s100, 0
      %s103 = sadd.s32 %s102, 1
      %s104 = scalar_select %p101, %s102, %s103
      %p107 = pneg %p101
      %p108 = scmp.eq.s32.totalorder %s22, 1
      %p109 = por %p107, %p108
      %p110 = scmp.ne.s32.totalorder %s102, %s105
      %p111 = scmp.eq.s32.totalorder %s22, 0
      %p112 = por %p110, %p111
      %p113 = scmp.ne.s32.totalorder %s102, %s105
      %p114 = scmp.eq.s32.totalorder %s27, 1
      %p115 = por %p113, %p114
      %p116 = scmp.ne.s32.totalorder %s105, %s106
      %p117 = scmp.eq.s32.totalorder %s27, 0
      %p118 = por %p116, %p117
      %p119 = scmp.ne.s32.totalorder %s105, %s106
      %p120 = scmp.eq.s32.totalorder %s28, 1
      %p121 = por %p119, %p120
      %p123 = scmp.ne.s32.totalorder %s106, %s122
      %p124 = scmp.eq.s32.totalorder %s28, 0
      %p125 = por %p123, %p124
      %s126 = sadd.s32 %s29, %s30
      %s127 = sadd.s32 %s41, %s37
      %s128 = ssub.s32 %s126, %s127
      %p129 = scmp.eq.s32.totalorder %s128, 0
      %s131 = sadd.s32 %s130, 1
      %s132 = scalar_select %p129, %s130, %s131
      %p135 = pneg %p129
      %p136 = scmp.eq.s32.totalorder %s22, 1
      %p137 = por %p135, %p136
      %p138 = scmp.ne.s32.totalorder %s130, %s133
      %p139 = scmp.eq.s32.totalorder %s22, 0
      %p140 = por %p138, %p139
      %p141 = scmp.ne.s32.totalorder %s130, %s133
      %p142 = scmp.eq.s32.totalorder %s27, 1
      %p143 = por %p141, %p142
      %p144 = scmp.ne.s32.totalorder %s133, %s134
      %p145 = scmp.eq.s32.totalorder %s27, 0
      %p146 = por %p144, %p145
      %p147 = scmp.ne.s32.totalorder %s133, %s134
      %p148 = scmp.eq.s32.totalorder %s28, 1
      %p149 = por %p147, %p148
      %p151 = scmp.ne.s32.totalorder %s134, %s150
      %p152 = scmp.eq.s32.totalorder %s28, 0
      %p153 = por %p151, %p152
      %s154 = ssub.s32 %s29, %s41
      %p155 = scmp.eq.s32.totalorder %s154, 0
      %s157 = sadd.s32 %s156, 1
      %s158 = scalar_select %p155, %s156, %s157
      %p161 = pneg %p155
      %p162 = scmp.eq.s32.totalorder %s22, 1
      %p163 = por %p161, %p162
      %p164 = scmp.ne.s32.totalorder %s156, %s159
      %p165 = scmp.eq.s32.totalorder %s22, 0
      %p166 = por %p164, %p165
      %p167 = scmp.ne.s32.totalorder %s156, %s159
      %p168 = scmp.eq.s32.totalorder %s27, 1
      %p169 = por %p167, %p168
      %p170 = scmp.ne.s32.totalorder %s159, %s160
      %p171 = scmp.eq.s32.totalorder %s27, 0
      %p172 = por %p170, %p171
      %p173 = scmp.ne.s32.totalorder %s159, %s160
      %p174 = scmp.eq.s32.totalorder %s28, 1
      %p175 = por %p173, %p174
      %p177 = scmp.ne.s32.totalorder %s160, %s176
      %p178 = scmp.eq.s32.totalorder %s28, 0
      %p179 = por %p177, %p178
      %p180 = scmp.le.s32.totalorder 1, %s22
      %p181 = scmp.lt.s32.totalorder %s22, 3
      %p182 = pnand %p180, %p181
      %p183 = pneg %p182
      // Predicated region
      $region9: #{tpu_custom_call.1} parent=5 // pred_check
        _
      $region10: #{tpu_custom_call.1} parent=5 // pred_check_branch
        %185 = sbr.rel (%p182) target = $region12
      $region11: #{tpu_custom_call.1} parent=5 // pred_region
        %s186 = ssub.s32 %s22, 1
      $region12: #{tpu_custom_call.1} parent=5 // pred_fallthru
        _
      %p187 = scmp.lt.s32.totalorder %s22, 2
      // Predicated region
      $region13: #{tpu_custom_call.1} parent=5 // pred_check
        %p188 = pneg %p187
      $region14: #{tpu_custom_call.1} parent=5 // pred_check_branch
        %190 = sbr.rel (%p188) target = $region16
      $region15: #{tpu_custom_call.1} parent=5 // pred_region
        // Predicated region
        $region17: #{tpu_custom_call.1} parent=15 // pred_check
          %p191 = pneg %p56
        $region18: #{tpu_custom_call.1} parent=15 // pred_check_branch
          %193 = sbr.rel (%p191) target = $region20
        $region19: #{tpu_custom_call.1} parent=15 // pred_region
          %s194 = sand.u32 %s46, 1
          %s195 = scalar_lea.sflag [#allocation4], %s194
          %s196 = sand.u32 %s46, 1
          %s197 = smul.addr %s196, 8
          %s198 = scalar_lea.vmem [#allocation3], %s197
          %s199 = sadd.s32 %s29, %s30
          %s201 = ssub.s32 128, 128
          %202 = vsyncadd %s195, %s201
          %s203 = smul.addr %s199, 128
          %s204 = scalar_lea.hbm %s0, %s203
          %s206 = sshll.u32 %s198, 4
          %s207 = int_to_ptr.vmem [resolvable:$true] %s206
          %209 = dma.hbm_to_vmem [thread:$0]  %s204, 128, %s207, %s195
        $region20: #{tpu_custom_call.1} parent=15 // pred_fallthru
          _
        // Predicated region
        $region21: #{tpu_custom_call.1} parent=15 // pred_check
          %p210 = pneg %p84
        $region22: #{tpu_custom_call.1} parent=15 // pred_check_branch
          %212 = sbr.rel (%p210) target = $region24
        $region23: #{tpu_custom_call.1} parent=15 // pred_region
          %s213 = sand.u32 %s22, 1
          %s214 = scalar_lea.sflag [#allocation7], %s213
          %s215 = sand.u32 %s74, 1
          %s216 = smul.addr %s215, 8
          %s217 = scalar_lea.vmem [#allocation6], %s216
          %s218 = sadd.s32 %s29, %s30
          %s220 = ssub.s32 128, 128
          %221 = vsyncadd %s214, %s220
          %s222 = smul.addr %s218, 128
          %s223 = scalar_lea.hbm %s1, %s222
          %s225 = sshll.u32 %s217, 4
          %s226 = int_to_ptr.vmem [resolvable:$true] %s225
          %228 = dma.hbm_to_vmem [thread:$0]  %s223, 128, %s226, %s214
        $region24: #{tpu_custom_call.1} parent=15 // pred_fallthru
          _
        // Predicated region
        $region25: #{tpu_custom_call.1} parent=15 // pred_check
          %p229 = pneg %p112
        $region26: #{tpu_custom_call.1} parent=15 // pred_check_branch
          %231 = sbr.rel (%p229) target = $region28
        $region27: #{tpu_custom_call.1} parent=15 // pred_region
          %s232 = sand.u32 %s22, 1
          %s233 = scalar_lea.sflag [#allocation7], %s232
          %s234 = sand.u32 %s102, 1
          %s235 = smul.addr %s234, 8
          %s236 = scalar_lea.vmem [#allocation8], %s235
          %s237 = sadd.s32 %s29, %s30
          %s239 = ssub.s32 128, 128
          %240 = vsyncadd %s233, %s239
          %s241 = smul.addr %s237, 128
          %s242 = scalar_lea.hbm %s2, %s241
          %s244 = sshll.u32 %s236, 4
          %s245 = int_to_ptr.vmem [resolvable:$true] %s244
          %247 = dma.hbm_to_vmem [thread:$0]  %s242, 128, %s245, %s233
        $region28: #{tpu_custom_call.1} parent=15 // pred_fallthru
          _
        // Predicated region
        $region29: #{tpu_custom_call.1} parent=15 // pred_check
          %p248 = pneg %p140
        $region30: #{tpu_custom_call.1} parent=15 // pred_check_branch
          %250 = sbr.rel (%p248) target = $region32
        $region31: #{tpu_custom_call.1} parent=15 // pred_region
          %s251 = sand.u32 %s130, 1
          %s252 = scalar_lea.sflag [#allocation10], %s251
          %s253 = sand.u32 %s130, 1
          %s254 = smul.addr %s253, 24
          %s255 = scalar_lea.vmem [#allocation9], %s254
          %s256 = sadd.s32 %s29, %s30
          %s258 = ssub.s32 384, 384
          %259 = vsyncadd %s252, %s258
          %s260 = smul.addr %s256, 128
          %s261 = scalar_lea.hbm %s3, %s260
          %s262 = sshll.u32 %s255, 4
          %s263 = int_to_ptr.vmem [resolvable:$true] %s262
          %268 = dma.hbm_to_vmem [thread:$0]  %s261, 384, %s263, %s252, 256, 128, 8
        $region32: #{tpu_custom_call.1} parent=15 // pred_fallthru
          _
      $region16: #{tpu_custom_call.1} parent=5 // pred_fallthru
        _
      %p269 = scmp.le.s32.totalorder 1, %s22
      %p270 = scmp.lt.s32.totalorder %s22, 3
      %p271 = pnand %p269, %p270
      %p272 = pneg %p271
      // Predicated region
      $region33: #{tpu_custom_call.1} parent=5 // pred_check
        _
      $region34: #{tpu_custom_call.1} parent=5 // pred_check_branch
        %274 = sbr.rel (%p271) target = $region36
      $region35: #{tpu_custom_call.1} parent=5 // pred_region
        %s275 = ssub.s32 %s22, 1
        %s276 = sand.u32 %s49, 1
        %s277 = scalar_lea.sflag [#allocation4], %s276
        %s278 = sand.u32 %s49, 1
        %s279 = smul.addr %s278, 8
        %s280 = scalar_lea.vmem [#allocation3], %s279
        // Predicated region
        $region37: #{tpu_custom_call.1} parent=35 // pred_check
          %p281 = pneg %p62
        $region38: #{tpu_custom_call.1} parent=35 // pred_check_branch
          %283 = sbr.rel (%p281) target = $region40
        $region39: #{tpu_custom_call.1} parent=35 // pred_region
          %284 = dma.done %s277, 128
        $region40: #{tpu_custom_call.1} parent=35 // pred_fallthru
          _
        %s285 = sand.u32 %s27, 1
        %s286 = scalar_lea.sflag [#allocation7], %s285
        %s287 = sand.u32 %s77, 1
        %s288 = smul.addr %s287, 8
        %s289 = scalar_lea.vmem [#allocation6], %s288
        // Predicated region
        $region41: #{tpu_custom_call.1} parent=35 // pred_check
          %p290 = pneg %p90
        $region42: #{tpu_custom_call.1} parent=35 // pred_check_branch
          %292 = sbr.rel (%p290) target = $region44
        $region43: #{tpu_custom_call.1} parent=35 // pred_region
          %293 = dma.done %s286, 128
        $region44: #{tpu_custom_call.1} parent=35 // pred_fallthru
          _
        %s294 = sand.u32 %s27, 1
        %s295 = scalar_lea.sflag [#allocation7], %s294
        %s296 = sand.u32 %s105, 1
        %s297 = smul.addr %s296, 8
        %s298 = scalar_lea.vmem [#allocation8], %s297
        // Predicated region
        $region45: #{tpu_custom_call.1} parent=35 // pred_check
          %p299 = pneg %p118
        $region46: #{tpu_custom_call.1} parent=35 // pred_check_branch
          %301 = sbr.rel (%p299) target = $region48
        $region47: #{tpu_custom_call.1} parent=35 // pred_region
          %302 = dma.done %s295, 128
        $region48: #{tpu_custom_call.1} parent=35 // pred_fallthru
          _
        %s303 = sand.u32 %s133, 1
        %s304 = scalar_lea.sflag [#allocation10], %s303
        %s305 = sand.u32 %s133, 1
        %s306 = smul.addr %s305, 24
        %s307 = scalar_lea.vmem [#allocation9], %s306
        // Predicated region
        $region49: #{tpu_custom_call.1} parent=35 // pred_check
          %p308 = pneg %p146
        $region50: #{tpu_custom_call.1} parent=35 // pred_check_branch
          %310 = sbr.rel (%p308) target = $region52
        $region51: #{tpu_custom_call.1} parent=35 // pred_region
          %311 = dma.done %s304, 384
        $region52: #{tpu_custom_call.1} parent=35 // pred_fallthru
          _
        %s312 = sand.u32 %s49, 1
        %s313 = scalar_lea.sflag [#allocation4], %s312
        %s314 = sand.u32 %s49, 1
        %s315 = smul.addr %s314, 8
        %s316 = scalar_lea.vmem [#allocation3], %s315
        %p317 = pneg %p62
        %p318 = pneg %p59
        %s319 = sand.u32 %s27, 1
        %s320 = scalar_lea.sflag [#allocation7], %s319
        %s321 = sand.u32 %s77, 1
        %s322 = smul.addr %s321, 8
        %s323 = scalar_lea.vmem [#allocation6], %s322
        %p324 = pneg %p90
        %p325 = pneg %p87
        %s326 = sand.u32 %s27, 1
        %s327 = scalar_lea.sflag [#allocation7], %s326
        %s328 = sand.u32 %s105, 1
        %s329 = smul.addr %s328, 8
        %s330 = scalar_lea.vmem [#allocation8], %s329
        %p331 = pneg %p118
        %p332 = pneg %p115
        %s333 = sand.u32 %s133, 1
        %s334 = scalar_lea.sflag [#allocation10], %s333
        %s335 = sand.u32 %s133, 1
        %s336 = smul.addr %s335, 24
        %s337 = scalar_lea.vmem [#allocation9], %s336
        %p338 = pneg %p146
        %p339 = pneg %p143
        %p340 = pneg %p172
        %p341 = pneg %p169
        %s342 = sand.u32 %s159, 1
        %s343 = scalar_lea.sflag [#allocation5], %s342
        %s344 = sand.u32 %s159, 1
        %s345 = smul.addr %s344, 8
        %s346 = scalar_lea.vmem [#allocation11], %s345
        %s347 = sadd.s32 %s31, %s32
        %s348 = sadd.s32 %s31, %s32
        %s349 = sadd.s32 %s31, %s32
        %s350 = sadd.s32 %s31, %s32
        %p351 = scmp.eq.s32.totalorder %s32, 0
        // Predicated region
        $region53: #{tpu_custom_call.1} parent=35 // pred_check
          %p352 = pneg %p351
        $region54: #{tpu_custom_call.1} parent=35 // pred_check_branch
          %354 = sbr.rel (%p352) target = $region56
        $region55: #{tpu_custom_call.1} parent=35 // pred_region
          %355 = vst [vmem:[#allocation2] sm:$0xff] 0.0
        $region56: #{tpu_custom_call.1} parent=35 // pred_fallthru
          _
        %v356 = vld [vmem:[%s280] sm:$0xff]
        %v357 = vld [vmem:[%s289] sm:$0xff]
        %v358 = vld [vmem:[%s298] sm:$0xff]
        %v359 = vld [vmem:[%s307] sm:$0xff]
        %s360 = scalar_lea.vmem %s307, 8 [#allocation9]
        %v361 = vld [vmem:[%s360] sm:$0xff]
        %s362 = scalar_lea.vmem %s307, 16 [#allocation9]
        %v363 = vld [vmem:[%s362] sm:$0xff]
        %v364 = vsub.f32 %v356, %v359
        %v365 = vsub.f32 %v357, %v361
        %v366 = vlog2.pop %v358
        %v367 = vmul.f32 %v366, 0.6931472
        %v368 = vmax.f32 %v367, -100.0
        %v369 = vsub.f32 1.0, %v358
        %v370 = vlog2.pop %v369
        %v371 = vmul.f32 %v370, 0.6931472
        %v372 = vmax.f32 %v371, -100.0
        %v373 = vld [vmem:[#allocation2] sm:$0xff]
        %v374 = vmul.f32 %v364, 0.5
        %v375 = vmul.f32 %v374, %v364
        %v376 = vmul.f32 %v365, %v365
        %v377 = vadd.f32 %v375, %v376
        %v378 = vmul.f32 %v363, %v368
        %v379 = vsub.f32 1.0, %v363
        %v380 = vmul.f32 %v379, %v372
        %v381 = vadd.f32 %v378, %v380
        %v382 = vsub.f32 %v377, %v381
        %v383 = vadd.f32 %v373, %v382
        %384 = vst [vmem:[#allocation2] sm:$0xff] %v383
        // Predicated region
        $region57: #{tpu_custom_call.1} parent=35 // pred_check
          %p385 = pneg %p351
        $region58: #{tpu_custom_call.1} parent=35 // pred_check_branch
          %387 = sbr.rel (%p385) target = $region60
        $region59: #{tpu_custom_call.1} parent=35 // pred_region
          %v388 = vld [vmem:[#allocation2] sm:$0xff]
          %v389 = vadd.f32 %v388, 0.0
          %390 = vst [vmem:[%s346] sm:$0xff] %v389
        $region60: #{tpu_custom_call.1} parent=35 // pred_fallthru
          _
        %s391 = sand.u32 %s159, 1
        %s392 = scalar_lea.sflag [#allocation5], %s391
        %s393 = sand.u32 %s159, 1
        %s394 = smul.addr %s393, 8
        %s395 = scalar_lea.vmem [#allocation11], %s394
        // Predicated region
        $region61: #{tpu_custom_call.1} parent=35 // pred_check
          %p396 = pneg %p169
        $region62: #{tpu_custom_call.1} parent=35 // pred_check_branch
          %398 = sbr.rel (%p396) target = $region64
        $region63: #{tpu_custom_call.1} parent=35 // pred_region
          %s400 = ssub.s32 128, 128
          %401 = vsyncadd %s392, %s400
          %s402 = smul.addr %s31, 128
          %s403 = scalar_lea.hbm %s4, %s402
          %s405 = sshll.u32 %s395, 4
          %s406 = int_to_ptr.vmem [resolvable:$true] %s405
          %408 = dma.vmem_to_hbm [thread:$0]  %s406, 128, %s403, %s392
        $region64: #{tpu_custom_call.1} parent=35 // pred_fallthru
          _
      $region36: #{tpu_custom_call.1} parent=5 // pred_fallthru
        _
      %p409 = scmp.le.s32.totalorder 2, %s22
      // Predicated region
      $region65: #{tpu_custom_call.1} parent=5 // pred_check
        %p410 = pneg %p409
      $region66: #{tpu_custom_call.1} parent=5 // pred_check_branch
        %412 = sbr.rel (%p410) target = $region68
      $region67: #{tpu_custom_call.1} parent=5 // pred_region
        %s413 = ssub.s32 %s22, 2
        // Predicated region
        $region69: #{tpu_custom_call.1} parent=67 // pred_check
          %p414 = pneg %p175
        $region70: #{tpu_custom_call.1} parent=67 // pred_check_branch
          %416 = sbr.rel (%p414) target = $region72
        $region71: #{tpu_custom_call.1} parent=67 // pred_region
          %s417 = sand.u32 %s160, 1
          %s418 = scalar_lea.sflag [#allocation5], %s417
          %s419 = sand.u32 %s160, 1
          %s420 = smul.addr %s419, 8
          %s421 = scalar_lea.vmem [#allocation11], %s420
          %422 = dma.done %s418, 128
        $region72: #{tpu_custom_call.1} parent=67 // pred_fallthru
          _
      $region68: #{tpu_custom_call.1} parent=5 // pred_fallthru
        _
    $region6: #{tpu_custom_call.1} parent=1 // loop_footer
      %s26 = sadd.s32 1, %s22
    $region7: #{tpu_custom_call.1} parent=1 // loop_footer_branch
      %21 = sbr.rel target = $region3
    $region8: #{tpu_custom_call.1} parent=1 // loop_exit
      _
    %423 = vsyncpa [#allocation4], 1
    %s424 = scalar_lea.sflag [#allocation4], 1
    %425 = vsyncpa %s424, 1
    %426 = vsyncpa [#allocation7], 1
    %s427 = scalar_lea.sflag [#allocation7], 1
    %428 = vsyncpa %s427, 1
    %429 = vsyncpa [#allocation10], 1
    %s430 = scalar_lea.sflag [#allocation10], 1
    %431 = vsyncpa %s430, 1
    %432 = vsyncpa [#allocation5], 1
    %s433 = scalar_lea.sflag [#allocation5], 1
    %434 = vsyncpa %s433, 1

</llo_original>
